<compile_context>
chip_gen: v6e
topology: v6e:2x2x1
jax: 0.10.0
libtpu: 0.0.40
codegen_flags: <defaults>
</compile_context>

<pallas_src>
import functools

import jax
import jax.numpy as jnp
import numpy as np
from jax.experimental import pallas as pl
from jax.experimental.pallas import tpu as pltpu

NUM_HEADS = 2
OUT_PAD = 128  # lane width of the merged output slab


def _round_up(x, m):
    return (x + m - 1) // m * m


def _pad_to(x, shape):
    return jnp.pad(x, [(0, s - d) for d, s in zip(x.shape, shape)])


# ----------------------------------------------------------------------------
# Pallas kernel: fused forward of NUM_HEADS MLPs over one batch tile.
#
# Multi-layer ref order:
#   obs, w0_cat, b0_cat, (wh_0, bh_0, ..., wh_{H-1}, bh_{H-1}), w_last, b_last, out
#     obs     : (block_b, obs_dim)            f32  (cast to bf16 in-kernel)
#     w0_cat  : (obs_dim, num_heads*h_pad)    bf16 (heads fused along N)
#     b0_cat  : (1, num_heads*h_pad)          f32
#     wh_l    : (num_heads, h_pad, h_pad)     bf16
#     bh_l    : (num_heads, 1, h_pad)         f32
#     w_last  : (num_heads, h_pad, 128)       bf16 (head h's value column at lane h)
#     b_last  : (1, 128)                      f32  (pre-summed, disjoint lanes)
#     out     : (block_b, 128)                f32  (head h's value in lane h)
# Single-layer (hidden_depth == 0) ref order:  obs, w_out, b_out, out
# ----------------------------------------------------------------------------
def _double_mlp_kernel(*refs, num_heads, num_hidden, single_layer, compute_dtype):
    obs_ref = refs[0]
    out_ref = refs[-1]
    x0 = obs_ref[...].astype(compute_dtype)          # cast on idle VPU, no HBM round-trip

    if single_layer:
        w = refs[1][...]                              # (obs_dim, 128)
        b = refs[2][...]                              # (1, 128)
        y = jnp.dot(x0, w, preferred_element_type=jnp.float32) + b
        out_ref[...] = y.astype(out_ref.dtype)
        return

    # ---- layer 0, fused across heads: one (block_b, obs_dim) x (obs_dim, 2*h_pad) ----
    w0 = refs[1][...]
    b0 = refs[2][...]
    h = jnp.dot(x0, w0, preferred_element_type=jnp.float32) + b0
    h = jnp.maximum(h, 0.0).astype(compute_dtype)     # (block_b, num_heads*h_pad)
    h_pad = h.shape[1] // num_heads

    # ---- per-head hidden layers + merged 128-lane final layer ----
    acc = None
    for head in range(num_heads):                     # unrolled, independent heads
        x = h[:, head * h_pad:(head + 1) * h_pad]     # lane-aligned static slice
        for l in range(num_hidden):
            w = refs[3 + 2 * l][head]                 # (h_pad, h_pad)
            b = refs[4 + 2 * l][head]                 # (1, h_pad)
            y = jnp.dot(x, w, preferred_element_type=jnp.float32) + b
            x = jnp.maximum(y, 0.0).astype(compute_dtype)
        w_last = refs[3 + 2 * num_hidden][head]       # (h_pad, 128), lane h is real
        y = jnp.dot(x, w_last, preferred_element_type=jnp.float32)
        acc = y if acc is None else acc + y           # exact: heads occupy disjoint lanes
    b_last = refs[4 + 2 * num_hidden][...]            # (1, 128)
    out_ref[...] = (acc + b_last).astype(out_ref.dtype)


# ----------------------------------------------------------------------------
# Parameter construction (orthogonal weights, zero biases — mimics util.weight_init)
# ----------------------------------------------------------------------------
def _orthogonal(key, in_dim, out_dim, dtype=jnp.float32):
    n_rows, n_cols = max(in_dim, out_dim), min(in_dim, out_dim)
    a = jax.random.normal(key, (n_rows, n_cols), dtype=jnp.float32)
    q, r = jnp.linalg.qr(a)
    q = q * jnp.sign(jnp.diagonal(r))[None, :]
    if in_dim < out_dim:
        q = q.T
    return q.astype(dtype)[:in_dim, :out_dim]


def make_mlp_params(key, obs_dim, hidden_dim, out_dim, hidden_depth):
    dims = [obs_dim] + [hidden_dim] * hidden_depth + [out_dim]
    params = []
    for i in range(len(dims) - 1):
        key, wk = jax.random.split(key)
        w = _orthogonal(wk, dims[i], dims[i + 1])         # (in, out)
        b = jnp.zeros((1, dims[i + 1]), jnp.float32)      # (1, out)
        params.append((w, b))
    return params


def pack_params(per_head_params, compute_dtype=jnp.bfloat16):
    """Pack per-head MLP params for the fused kernel (see kernel docstring)."""
    num_heads = len(per_head_params)
    num_layers = len(per_head_params[0])
    assert num_heads <= OUT_PAD

    if num_layers == 1:
        # hidden_depth == 0: single Linear(obs_dim, 1) per head, merged into one
        # (obs_dim, 128) weight (head h's column at lane h; exact, disjoint lanes).
        in_dim = per_head_params[0][0][0].shape[0]
        w = jnp.zeros((in_dim, OUT_PAD), jnp.float32)
        b = jnp.zeros((1, OUT_PAD), jnp.float32)
        for hh, p in enumerate(per_head_params):
            wh, bh = p[0]
            w = w.at[:, hh:hh + 1].set(wh)
            b = b.at[:, hh:hh + 1].set(bh)
        return dict(flat=(w.astype(compute_dtype), b), num_heads=num_heads,
                    num_hidden=0, single_layer=True, h_pad=0,
                    compute_dtype=compute_dtype)

    hidden = per_head_params[0][0][0].shape[1]
    h_pad = _round_up(hidden, 128)
    num_hidden = num_layers - 2

    # Layer 0: fuse heads along N (shared obs input). K stays == obs_dim (no pad).
    w0 = jnp.concatenate(
        [_pad_to(p[0][0], (p[0][0].shape[0], h_pad)) for p in per_head_params], axis=1)
    b0 = jnp.concatenate(
        [_pad_to(p[0][1], (1, h_pad)) for p in per_head_params], axis=1)
    flat = [w0.astype(compute_dtype), b0.astype(jnp.float32)]

    # Hidden layers: stacked per head.
    for l in range(1, 1 + num_hidden):
        w = jnp.stack([_pad_to(p[l][0], (h_pad, h_pad)) for p in per_head_params])
        b = jnp.stack([_pad_to(p[l][1], (1, h_pad)) for p in per_head_params])
        flat += [w.astype(compute_dtype), b.astype(jnp.float32)]

    # Final layer: head h's single value column placed at lane h; other lanes are
    # exact zeros by construction, so summing the per-head results is exact.
    w_last = jnp.zeros((num_heads, h_pad, OUT_PAD), jnp.float32)
    b_last = jnp.zeros((1, OUT_PAD), jnp.float32)
    for hh, p in enumerate(per_head_params):
        wl, bl = p[-1]                                    # (hidden, 1), (1, 1)
        w_last = w_last.at[hh, :hidden, hh:hh + 1].set(wl)
        b_last = b_last.at[:, hh:hh + 1].set(bl)
    flat += [w_last.astype(compute_dtype), b_last]

    return dict(flat=tuple(flat), num_heads=num_heads, num_hidden=num_hidden,
                single_layer=False, h_pad=h_pad, compute_dtype=compute_dtype)


# ----------------------------------------------------------------------------
# Fused forward wrapper.
# ----------------------------------------------------------------------------
def double_mlp_forward(obs, packed, *, block_b=None):
    B, obs_dim = obs.shape
    flat = packed["flat"]
    num_heads = packed["num_heads"]
    num_hidden = packed["num_hidden"]
    single_layer = packed["single_layer"]
    h_pad = packed["h_pad"]
    compute_dtype = packed["compute_dtype"]

    if block_b is None:
        block_b = min(1024, _round_up(B, 8))
        if B >= 256:
            # guarantee >= 2 grid steps so "parallel" can shard across v7x's 2 TCs
            block_b = min(block_b, _round_up(-(-B // 2), 8))
    block_b = max(8, _round_up(block_b, 8))
    B_pad = _round_up(max(B, block_b), block_b)

    # Only the batch dim is ever padded; obs stays f32 (cast happens in-kernel).
    x = obs
    if B_pad != B:
        x = jnp.pad(x, ((0, B_pad - B), (0, 0)))

    kernel = functools.partial(_double_mlp_kernel, num_heads=num_heads,
                               num_hidden=num_hidden, single_layer=single_layer,
                               compute_dtype=compute_dtype)

    def _const_map(rank):
        zeros = (0,) * rank
        return lambda i: zeros

    in_specs = [pl.BlockSpec((block_b, obs_dim), lambda i: (i, 0))]
    for a in flat:
        in_specs.append(pl.BlockSpec(a.shape, _const_map(a.ndim)))  # resident weights

    # VMEM budget: resident params (worst-case 2x buffered) + double-buffered
    # f32 obs/out tiles + live-activation slack.  Capped at 48 MiB (headroom
    # under v7x's 64 MiB physical VMEM); no extra hedge on top.
    param_bytes = sum(int(a.size) * a.dtype.itemsize for a in flat)
    widest = max([obs_dim, OUT_PAD] + ([num_heads * h_pad] if not single_layer else []))
    est = (2 * param_bytes
           + 2 * block_b * obs_dim * 4
           + 2 * block_b * OUT_PAD * 4
           + 4 * block_b * widest * 4)
    vmem_limit = int(min(max(est, 8 << 20), 48 << 20))

    out = pl.pallas_call(
        kernel,
        out_shape=jax.ShapeDtypeStruct((B_pad, OUT_PAD), obs.dtype),
        grid_spec=pltpu.PrefetchScalarGridSpec(
            num_scalar_prefetch=0,
            grid=(B_pad // block_b,),
            in_specs=in_specs,
            out_specs=pl.BlockSpec((block_b, OUT_PAD), lambda i: (i, 0)),
        ),
        compiler_params=pltpu.CompilerParams(
            dimension_semantics=("parallel",),
            vmem_limit_bytes=vmem_limit),
    )(x, *flat)

    # Head h's value lives in lane h of the 128-wide slab.
    return tuple(out[:B, h:h + 1] for h in range(num_heads))


class DoubleVCriticPallas:
    """JAX/Pallas port of DoubleVCritic: two MLP value heads, one fused kernel."""

    def __init__(self, obs_dim, hidden_dim, hidden_depth, key,
                 compute_dtype=jnp.bfloat16):
        k1, k2 = jax.random.split(key)
        self.q1_params = make_mlp_params(k1, obs_dim, hidden_dim, 1, hidden_depth)
        self.q2_params = make_mlp_params(k2, obs_dim, hidden_dim, 1, hidden_depth)
        self.compute_dtype = compute_dtype
        self.packed = pack_params([self.q1_params, self.q2_params], compute_dtype)
        self.outputs = {}

    def __call__(self, obs):
        q1, q2 = double_mlp_forward(obs, self.packed)
        self.outputs["q1"] = q1
        self.outputs["q2"] = q2
        return (q1, q2)


# ----------------------------------------------------------------------------
# Pure-JAX reference (same dtype flow as the kernel: bf16 matmuls, f32 acc).
# ----------------------------------------------------------------------------
def mlp_ref(obs, params, compute_dtype=jnp.bfloat16):
    x = obs.astype(compute_dtype)
    for i, (w, b) in enumerate(params):
        y = jnp.dot(x, w.astype(compute_dtype),
                    preferred_element_type=jnp.float32) + b.astype(jnp.float32)
        if i < len(params) - 1:
            x = jnp.maximum(y, 0.0).astype(compute_dtype)
        else:
            return y.astype(obs.dtype)


if __name__ == "__main__":
    # Small shapes consistent with the module: obs (batch, obs_dim).
    batch, obs_dim, hidden_dim, hidden_depth = 8, 16, 32, 2

    key = jax.random.PRNGKey(0)
    k_obs, k_params = jax.random.split(key)
    obs = jax.random.normal(k_obs, (batch, obs_dim), dtype=jnp.float32)

    critic = DoubleVCriticPallas(obs_dim, hidden_dim, hidden_depth, k_params)

    q1, q2 = critic(obs)
    q1 = jax.block_until_ready(q1)
    q2 = jax.block_until_ready(q2)

    q1_ref = mlp_ref(obs, critic.q1_params)
    q2_ref = mlp_ref(obs, critic.q2_params)
    assert q1.shape == (batch, 1) and q2.shape == (batch, 1)
    np.testing.assert_allclose(np.asarray(q1), np.asarray(q1_ref), rtol=1e-2, atol=1e-2)
    np.testing.assert_allclose(np.asarray(q2), np.asarray(q2_ref), rtol=1e-2, atol=1e-2)

    # Check 2: batch not a multiple of the tile -> batch padding + multi-step
    # "parallel" grid (megacore-friendly on v7x).
    obs2 = jax.random.normal(jax.random.PRNGKey(1), (300, obs_dim), dtype=jnp.float32)
    p1, p2 = double_mlp_forward(obs2, critic.packed, block_b=128)
    p1 = jax.block_until_ready(p1)
    p2 = jax.block_until_ready(p2)
    np.testing.assert_allclose(np.asarray(p1), np.asarray(mlp_ref(obs2, critic.q1_params)),
                               rtol=1e-2, atol=1e-2)
    np.testing.assert_allclose(np.asarray(p2), np.asarray(mlp_ref(obs2, critic.q2_params)),
                               rtol=1e-2, atol=1e-2)

    # Check 3: hidden_depth == 0 path (single Linear per head, merged output).
    critic0 = DoubleVCriticPallas(obs_dim, hidden_dim, 0, jax.random.PRNGKey(2))
    r1, r2 = critic0(obs)
    r1 = jax.block_until_ready(r1)
    r2 = jax.block_until_ready(r2)
    np.testing.assert_allclose(np.asarray(r1), np.asarray(mlp_ref(obs, critic0.q1_params)),
                               rtol=1e-2, atol=1e-2)
    np.testing.assert_allclose(np.asarray(r2), np.asarray(mlp_ref(obs, critic0.q2_params)),
                               rtol=1e-2, atol=1e-2)

    print("KERNEL_OK")
</pallas_src>

<mosaic_0001>
module attributes {stable_mosaic.version = 11 : i64} {
  func.func @_double_mlp_kernel(%arg0: i32, %arg1: memref<8x16xf32, #tpu.memory_space<vmem>>, %arg2: memref<16x256xbf16, #tpu.memory_space<vmem>>, %arg3: memref<1x256xf32, #tpu.memory_space<vmem>>, %arg4: memref<2x128x128xbf16, #tpu.memory_space<vmem>>, %arg5: memref<2x1x128xf32, #tpu.memory_space<vmem>>, %arg6: memref<2x128x128xbf16, #tpu.memory_space<vmem>>, %arg7: memref<1x128xf32, #tpu.memory_space<vmem>>, %arg8: memref<8x128xf32, #tpu.memory_space<vmem>>) attributes {dimension_semantics = [#tpu.dimension_semantics<parallel>], iteration_bounds = array<i64: 1>, scalar_prefetch = 0 : i64, scratch_operands = 0 : i64, tpu.core_type = #tpu.core_type<tc>, window_params = [{transform_indices = @transform_0, window_bounds = array<i64: 8, 16>}, {pipeline_mode = #tpu.pipeline_mode<synchronous>, transform_indices = @transform_1, window_bounds = array<i64: 16, 256>}, {pipeline_mode = #tpu.pipeline_mode<synchronous>, transform_indices = @transform_2, window_bounds = array<i64: 1, 256>}, {pipeline_mode = #tpu.pipeline_mode<synchronous>, transform_indices = @transform_3, window_bounds = array<i64: 2, 128, 128>}, {pipeline_mode = #tpu.pipeline_mode<synchronous>, transform_indices = @transform_4, window_bounds = array<i64: 2, 1, 128>}, {pipeline_mode = #tpu.pipeline_mode<synchronous>, transform_indices = @transform_5, window_bounds = array<i64: 2, 128, 128>}, {pipeline_mode = #tpu.pipeline_mode<synchronous>, transform_indices = @transform_6, window_bounds = array<i64: 1, 128>}, {transform_indices = @transform_7, window_bounds = array<i64: 8, 128>}]} {
    %c0 = arith.constant 0 : index
    %c0_0 = arith.constant 0 : index
    %0 = vector.load %arg1[%c0, %c0_0] : memref<8x16xf32, #tpu.memory_space<vmem>>, vector<8x16xf32>
    %1 = arith.truncf %0 : vector<8x16xf32> to vector<8x16xbf16>
    %c0_1 = arith.constant 0 : index
    %c0_2 = arith.constant 0 : index
    %2 = vector.load %arg2[%c0_1, %c0_2] : memref<16x256xbf16, #tpu.memory_space<vmem>>, vector<16x256xbf16>
    %c0_3 = arith.constant 0 : index
    %c0_4 = arith.constant 0 : index
    %3 = vector.load %arg3[%c0_3, %c0_4] : memref<1x256xf32, #tpu.memory_space<vmem>>, vector<1x256xf32>
    %cst = arith.constant dense<0.000000e+00> : vector<8x256xf32>
    %4 = tpu.matmul %1, %2, %cst {dimension_numbers = #tpu.dot_dimension_numbers<[1], [0], [0], [1], [0, 0, 1, 1], [], []>} : vector<8x16xbf16>, vector<16x256xbf16>, vector<8x256xf32> -> vector<8x256xf32>
    %5 = vector.broadcast %3 : vector<1x256xf32> to vector<8x256xf32>
    %6 = arith.addf %4, %5 : vector<8x256xf32>
    %cst_5 = arith.constant 0.000000e+00 : f32
    %7 = vector.broadcast %cst_5 : f32 to vector<8x256xf32>
    %8 = arith.maximumf %6, %7 : vector<8x256xf32>
    %9 = arith.truncf %8 : vector<8x256xf32> to vector<8x256xbf16>
    %10 = vector.extract_strided_slice %9 {offsets = [0, 0], sizes = [8, 128], strides = [1, 1]} : vector<8x256xbf16> to vector<8x128xbf16>
    %c0_6 = arith.constant 0 : index
    %c0_7 = arith.constant 0 : index
    %c0_8 = arith.constant 0 : index
    %11 = vector.load %arg4[%c0_6, %c0_7, %c0_8] : memref<2x128x128xbf16, #tpu.memory_space<vmem>>, vector<1x128x128xbf16>
    %12 = vector.shape_cast %11 : vector<1x128x128xbf16> to vector<128x128xbf16>
    %c0_9 = arith.constant 0 : index
    %c0_10 = arith.constant 0 : index
    %c0_11 = arith.constant 0 : index
    %13 = vector.load %arg5[%c0_9, %c0_10, %c0_11] : memref<2x1x128xf32, #tpu.memory_space<vmem>>, vector<1x1x128xf32>
    %14 = vector.shape_cast %13 : vector<1x1x128xf32> to vector<1x128xf32>
    %cst_12 = arith.constant dense<0.000000e+00> : vector<8x128xf32>
    %15 = tpu.matmul %10, %12, %cst_12 {dimension_numbers = #tpu.dot_dimension_numbers<[1], [0], [0], [1], [0, 0, 1, 1], [], []>} : vector<8x128xbf16>, vector<128x128xbf16>, vector<8x128xf32> -> vector<8x128xf32>
    %16 = vector.broadcast %14 : vector<1x128xf32> to vector<8x128xf32>
    %17 = arith.addf %15, %16 : vector<8x128xf32>
    %cst_13 = arith.constant 0.000000e+00 : f32
    %18 = vector.broadcast %cst_13 : f32 to vector<8x128xf32>
    %19 = arith.maximumf %17, %18 : vector<8x128xf32>
    %20 = arith.truncf %19 : vector<8x128xf32> to vector<8x128xbf16>
    %c0_14 = arith.constant 0 : index
    %c0_15 = arith.constant 0 : index
    %c0_16 = arith.constant 0 : index
    %21 = vector.load %arg6[%c0_14, %c0_15, %c0_16] : memref<2x128x128xbf16, #tpu.memory_space<vmem>>, vector<1x128x128xbf16>
    %22 = vector.shape_cast %21 : vector<1x128x128xbf16> to vector<128x128xbf16>
    %cst_17 = arith.constant dense<0.000000e+00> : vector<8x128xf32>
    %23 = tpu.matmul %20, %22, %cst_17 {dimension_numbers = #tpu.dot_dimension_numbers<[1], [0], [0], [1], [0, 0, 1, 1], [], []>} : vector<8x128xbf16>, vector<128x128xbf16>, vector<8x128xf32> -> vector<8x128xf32>
    %24 = vector.extract_strided_slice %9 {offsets = [0, 128], sizes = [8, 128], strides = [1, 1]} : vector<8x256xbf16> to vector<8x128xbf16>
    %c1 = arith.constant 1 : index
    %c0_18 = arith.constant 0 : index
    %c0_19 = arith.constant 0 : index
    %25 = vector.load %arg4[%c1, %c0_18, %c0_19] : memref<2x128x128xbf16, #tpu.memory_space<vmem>>, vector<1x128x128xbf16>
    %26 = vector.shape_cast %25 : vector<1x128x128xbf16> to vector<128x128xbf16>
    %c1_20 = arith.constant 1 : index
    %c0_21 = arith.constant 0 : index
    %c0_22 = arith.constant 0 : index
    %27 = vector.load %arg5[%c1_20, %c0_21, %c0_22] : memref<2x1x128xf32, #tpu.memory_space<vmem>>, vector<1x1x128xf32>
    %28 = vector.shape_cast %27 : vector<1x1x128xf32> to vector<1x128xf32>
    %cst_23 = arith.constant dense<0.000000e+00> : vector<8x128xf32>
    %29 = tpu.matmul %24, %26, %cst_23 {dimension_numbers = #tpu.dot_dimension_numbers<[1], [0], [0], [1], [0, 0, 1, 1], [], []>} : vector<8x128xbf16>, vector<128x128xbf16>, vector<8x128xf32> -> vector<8x128xf32>
    %30 = vector.broadcast %28 : vector<1x128xf32> to vector<8x128xf32>
    %31 = arith.addf %29, %30 : vector<8x128xf32>
    %cst_24 = arith.constant 0.000000e+00 : f32
    %32 = vector.broadcast %cst_24 : f32 to vector<8x128xf32>
    %33 = arith.maximumf %31, %32 : vector<8x128xf32>
    %34 = arith.truncf %33 : vector<8x128xf32> to vector<8x128xbf16>
    %c1_25 = arith.constant 1 : index
    %c0_26 = arith.constant 0 : index
    %c0_27 = arith.constant 0 : index
    %35 = vector.load %arg6[%c1_25, %c0_26, %c0_27] : memref<2x128x128xbf16, #tpu.memory_space<vmem>>, vector<1x128x128xbf16>
    %36 = vector.shape_cast %35 : vector<1x128x128xbf16> to vector<128x128xbf16>
    %cst_28 = arith.constant dense<0.000000e+00> : vector<8x128xf32>
    %37 = tpu.matmul %34, %36, %cst_28 {dimension_numbers = #tpu.dot_dimension_numbers<[1], [0], [0], [1], [0, 0, 1, 1], [], []>} : vector<8x128xbf16>, vector<128x128xbf16>, vector<8x128xf32> -> vector<8x128xf32>
    %38 = arith.addf %23, %37 : vector<8x128xf32>
    %c0_29 = arith.constant 0 : index
    %c0_30 = arith.constant 0 : index
    %39 = vector.load %arg7[%c0_29, %c0_30] : memref<1x128xf32, #tpu.memory_space<vmem>>, vector<1x128xf32>
    %40 = vector.broadcast %39 : vector<1x128xf32> to vector<8x128xf32>
    %41 = arith.addf %38, %40 : vector<8x128xf32>
    %c0_31 = arith.constant 0 : index
    %c0_32 = arith.constant 0 : index
    %42 = vector.load %arg8[%c0_31, %c0_32] : memref<8x128xf32, #tpu.memory_space<vmem>>, vector<8x128xf32>
    tpu.vector_store %arg8[%c0_31, %c0_32], %41 {strides = array<i32>} : memref<8x128xf32, #tpu.memory_space<vmem>>, vector<8x128xf32>,
    return
  }
  func.func @transform_0(%arg0: i32) -> (i32, i32) {
    %c0_i32 = arith.constant 0 : i32
    %c0_i32_0 = arith.constant 0 : i32
    return %arg0, %c0_i32 : i32, i32
  }
  func.func @transform_1(%arg0: i32) -> (i32, i32) {
    %c0_i32 = arith.constant 0 : i32
    %c0_i32_0 = arith.constant 0 : i32
    %c0_i32_1 = arith.constant 0 : i32
    return %c0_i32, %c0_i32_0 : i32, i32
  }
  func.func @transform_2(%arg0: i32) -> (i32, i32) {
    %c0_i32 = arith.constant 0 : i32
    %c0_i32_0 = arith.constant 0 : i32
    %c0_i32_1 = arith.constant 0 : i32
    return %c0_i32, %c0_i32_0 : i32, i32
  }
  func.func @transform_3(%arg0: i32) -> (i32, i32, i32) {
    %c0_i32 = arith.constant 0 : i32
    %c0_i32_0 = arith.constant 0 : i32
    %c0_i32_1 = arith.constant 0 : i32
    %c0_i32_2 = arith.constant 0 : i32
    return %c0_i32, %c0_i32_0, %c0_i32_1 : i32, i32, i32
  }
  func.func @transform_4(%arg0: i32) -> (i32, i32, i32) {
    %c0_i32 = arith.constant 0 : i32
    %c0_i32_0 = arith.constant 0 : i32
    %c0_i32_1 = arith.constant 0 : i32
    %c0_i32_2 = arith.constant 0 : i32
    return %c0_i32, %c0_i32_0, %c0_i32_1 : i32, i32, i32
  }
  func.func @transform_5(%arg0: i32) -> (i32, i32, i32) {
    %c0_i32 = arith.constant 0 : i32
    %c0_i32_0 = arith.constant 0 : i32
    %c0_i32_1 = arith.constant 0 : i32
    %c0_i32_2 = arith.constant 0 : i32
    return %c0_i32, %c0_i32_0, %c0_i32_1 : i32, i32, i32
  }
  func.func @transform_6(%arg0: i32) -> (i32, i32) {
    %c0_i32 = arith.constant 0 : i32
    %c0_i32_0 = arith.constant 0 : i32
    %c0_i32_1 = arith.constant 0 : i32
    return %c0_i32, %c0_i32_0 : i32, i32
  }
  func.func @transform_7(%arg0: i32) -> (i32, i32) {
    %c0_i32 = arith.constant 0 : i32
    %c0_i32_0 = arith.constant 0 : i32
    return %arg0, %c0_i32 : i32, i32
  }
}

</mosaic_0001>

<llo_original>
// kernel: tpu_custom_call.1
$region0: #{tpu_custom_call.1}
  #allocation0 [shape = 'u32[]', space=smem, size = 0x4, offset = 0x4, fixed_abs, tag = 'smem constant byte address 0x4 - core index']
  #allocation1 [shape = 'u32[144,128]{1,0:T(1,128)}', space=vmem, size = 0x12000, scoped, tag = 'internal scratch']
  %s0 = inlined_call_operand.hbm [shape: f32[8,16], index: 0, kind: input, shape index: {}]
  %s1 = inlined_call_operand.hbm [shape: bf16[16,256], index: 1, kind: input, shape index: {}]
  %s2 = inlined_call_operand.vmem [shape: f32[1,256], index: 2, kind: input, shape index: {}]
  %s3 = inlined_call_operand.hbm [shape: bf16[2,128,128], index: 3, kind: input, shape index: {}]
  %s4 = inlined_call_operand.vmem [shape: f32[2,1,128], index: 4, kind: input, shape index: {}]
  %s5 = inlined_call_operand.hbm [shape: bf16[2,128,128], index: 5, kind: input, shape index: {}]
  %s6 = inlined_call_operand.vmem [shape: f32[1,128], index: 6, kind: input, shape index: {}]
  %s7 = inlined_call_operand.hbm [shape: f32[8,128], index: 7, kind: output, shape index: {}]
  %s8 = sld [smem:[#allocation0]]
  $region54: #{tpu_custom_call.1} parent=0
    _
  %s10 = ssub.s32 1, %s8
  %s11 = scalar_select 0, %s10, %s8
  $region1: #{tpu_custom_call.1} parent=0
    #allocation2 [shape = 'u8[4096]{0}', space=vmem, size = 0x1000, scoped, tag = 'input window, operand 0, single buffered']
    #allocation3 [shape = 's32[1]{0}', space=sflag, size = 0x4, scoped, tag = 'scoped memory for tpu_custom_call.1']
    #allocation4 [shape = 's32[1]{0}', space=sflag, size = 0x4, scoped, tag = 'scoped memory for tpu_custom_call.1']
    #allocation5 [shape = 'u8[8192]{0}', space=vmem, size = 0x2000, scoped, tag = 'input window, operand 1, single buffered']
    #allocation6 [shape = 's32[1]{0}', space=sflag, size = 0x4, scoped, tag = 'scoped memory for tpu_custom_call.1']
    #allocation7 [shape = 'u8[65536]{0}', space=vmem, size = 0x10000, scoped, tag = 'input window, operand 3, single buffered']
    #allocation8 [shape = 'u8[65536]{0}', space=vmem, size = 0x10000, scoped, tag = 'input window, operand 5, single buffered']
    #allocation9 [shape = 's32[1]{0}', space=sflag, size = 0x4, scoped, tag = 'scoped memory for tpu_custom_call.1']
    #allocation10 [shape = 'u8[4096]{0}', space=vmem, size = 0x1000, scoped, tag = 'output window, operand 0, single buffered']
    %12 = vsyncpa [#allocation3], 0
    %13 = vsyncpa [#allocation6], 0
    %14 = vsyncpa [#allocation9], 0
    %15 = vsyncpa [#allocation4], 0
    // Predicated region
    $region2: #{tpu_custom_call.1} parent=1 // pred_check
      _
    $region3: #{tpu_custom_call.1} parent=1 // pred_check_branch
      %17 = sbr.rel (0) target = $region5
    $region4: #{tpu_custom_call.1} parent=1 // pred_region
      %s19 = ssub.s32 128, 128
      %20 = vsyncadd [#allocation3], %s19
      %s22 = sshll.u32 [#allocation2], 4
      %s23 = int_to_ptr.vmem [resolvable:$true] %s22
      %25 = dma.hbm_to_vmem [thread:$0]  %s0, 128, %s23, [#allocation3]
    $region5: #{tpu_custom_call.1} parent=1 // pred_fallthru
      _
    // Predicated region
    $region6: #{tpu_custom_call.1} parent=1 // pred_check
      _
    $region7: #{tpu_custom_call.1} parent=1 // pred_check_branch
      %27 = sbr.rel (0) target = $region9
    $region8: #{tpu_custom_call.1} parent=1 // pred_region
      %s29 = ssub.s32 256, 256
      %30 = vsyncadd [#allocation6], %s29
      %s31 = sshll.u32 [#allocation5], 4
      %s32 = int_to_ptr.vmem [resolvable:$true] %s31
      %37 = dma.hbm_to_vmem [thread:$0]  %s1, 256, %s32, [#allocation6], 128, 128, 8
    $region9: #{tpu_custom_call.1} parent=1 // pred_fallthru
      _
    // Predicated region
    $region10: #{tpu_custom_call.1} parent=1 // pred_check
      _
    $region11: #{tpu_custom_call.1} parent=1 // pred_check_branch
      %39 = sbr.rel (0) target = $region13
    $region12: #{tpu_custom_call.1} parent=1 // pred_region
      _
    $region13: #{tpu_custom_call.1} parent=1 // pred_fallthru
      _
    // Predicated region
    $region14: #{tpu_custom_call.1} parent=1 // pred_check
      _
    $region15: #{tpu_custom_call.1} parent=1 // pred_check_branch
      %41 = sbr.rel (0) target = $region17
    $region16: #{tpu_custom_call.1} parent=1 // pred_region
      %s43 = ssub.s32 2048, 2048
      %44 = vsyncadd [#allocation6], %s43
      %s45 = sshll.u32 [#allocation7], 4
      %s46 = int_to_ptr.vmem [resolvable:$true] %s45
      %51 = dma.hbm_to_vmem [thread:$0]  %s3, 2048, %s46, [#allocation6], 64, 64, 4
    $region17: #{tpu_custom_call.1} parent=1 // pred_fallthru
      _
    // Predicated region
    $region18: #{tpu_custom_call.1} parent=1 // pred_check
      _
    $region19: #{tpu_custom_call.1} parent=1 // pred_check_branch
      %53 = sbr.rel (0) target = $region21
    $region20: #{tpu_custom_call.1} parent=1 // pred_region
      _
    $region21: #{tpu_custom_call.1} parent=1 // pred_fallthru
      _
    // Predicated region
    $region22: #{tpu_custom_call.1} parent=1 // pred_check
      _
    $region23: #{tpu_custom_call.1} parent=1 // pred_check_branch
      %55 = sbr.rel (0) target = $region25
    $region24: #{tpu_custom_call.1} parent=1 // pred_region
      %s57 = ssub.s32 2048, 2048
      %58 = vsyncadd [#allocation9], %s57
      %s59 = sshll.u32 [#allocation8], 4
      %s60 = int_to_ptr.vmem [resolvable:$true] %s59
      %65 = dma.hbm_to_vmem [thread:$0]  %s5, 2048, %s60, [#allocation9], 64, 64, 4
    $region25: #{tpu_custom_call.1} parent=1 // pred_fallthru
      _
    // Predicated region
    $region26: #{tpu_custom_call.1} parent=1 // pred_check
      _
    $region27: #{tpu_custom_call.1} parent=1 // pred_check_branch
      %67 = sbr.rel (0) target = $region29
    $region28: #{tpu_custom_call.1} parent=1 // pred_region
      _
    $region29: #{tpu_custom_call.1} parent=1 // pred_fallthru
      _
    // Predicated region
    $region30: #{tpu_custom_call.1} parent=1 // pred_check
      _
    $region31: #{tpu_custom_call.1} parent=1 // pred_check_branch
      %69 = sbr.rel (0) target = $region33
    $region32: #{tpu_custom_call.1} parent=1 // pred_region
      %70 = dma.done [#allocation3], 128
    $region33: #{tpu_custom_call.1} parent=1 // pred_fallthru
      _
    // Predicated region
    $region34: #{tpu_custom_call.1} parent=1 // pred_check
      _
    $region35: #{tpu_custom_call.1} parent=1 // pred_check_branch
      %72 = sbr.rel (0) target = $region37
    $region36: #{tpu_custom_call.1} parent=1 // pred_region
      %73 = dma.done [#allocation6], 256
    $region37: #{tpu_custom_call.1} parent=1 // pred_fallthru
      _
    // Predicated region
    $region38: #{tpu_custom_call.1} parent=1 // pred_check
      _
    $region39: #{tpu_custom_call.1} parent=1 // pred_check_branch
      %75 = sbr.rel (0) target = $region41
    $region40: #{tpu_custom_call.1} parent=1 // pred_region
      %76 = dma.done [#allocation6], 2048
    $region41: #{tpu_custom_call.1} parent=1 // pred_fallthru
      _
    // Predicated region
    $region42: #{tpu_custom_call.1} parent=1 // pred_check
      _
    $region43: #{tpu_custom_call.1} parent=1 // pred_check_branch
      %78 = sbr.rel (0) target = $region45
    $region44: #{tpu_custom_call.1} parent=1 // pred_region
      %79 = dma.done [#allocation9], 2048
    $region45: #{tpu_custom_call.1} parent=1 // pred_fallthru
      _
    %v81 = vld [vmem:[#allocation2] sm:$0xff]
    %v82 = vpack.c.bf16 %v81, %v81
    %v83 = vld [vmem:[#allocation5] sm:$0xff]
    %v84 = vld [vmem:[#allocation5 + $0x8] sm:$0xff]
    %v85 = vld [vmem:[%s2] sm:$0x3]
    %v87 = vlaneseq
    %v88 = vshrl.u32 %v87, 7
    %v89 = vsub.s32 0, %v88
    %v90 = vrot.slane %v85, %v89
    %v91 = vlaneseq
    %v92 = vshrl.u32 %v91, 7
    %v93 = vsub.s32 1, %v92
    %v94 = vrot.slane %v85, %v93
    %v99 = vunpack.c.l.b16 %v83
    %v100 = vunpack.c.h.b16 %v83
    %v101 = vunpack.c.l.b16 %v84
    %v102 = vunpack.c.h.b16 %v84
    %v103 = vpack.c.b16 %v101, %v99
    %v104 = vpack.c.b16 %v102, %v100
    %vm107 = vcmask 130048
    %v109 = vsel %vm107, %v82, 0
    %111 = vmatprep.subr.bf16.mxu0 0
    %112 = vmatpush1.bf16.msra.mxu0 0
    %113 = vmatprep.subr.bf16.mxu0 0
    %114 = vmatpush1.bf16.msra.mxu0 0
    %115 = vmatprep.subr.bf16.mxu0 0
    %116 = vmatpush1.bf16.msra.mxu0 0
    %117 = vmatprep.subr.bf16.mxu0 0
    %118 = vmatpush1.bf16.msra.mxu0 0
    %119 = vmatprep.subr.bf16.mxu0 0
    %120 = vmatpush1.bf16.msra.mxu0 0
    %121 = vmatprep.subr.bf16.mxu0 0
    %122 = vmatpush1.bf16.msra.mxu0 0
    %123 = vmatprep.subr.bf16.mxu0 0
    %124 = vmatpush1.bf16.msra.mxu0 0
    %125 = vmatprep.subr.bf16.mxu0 %v104
    %126 = vmatpush1.bf16.msra.mxu0 %v103
    %127 = vmatprep.subr.bf16.mxu0 0
    %128 = vmatpush2.bf16.msra.mxu0 0
    %129 = vmatprep.subr.bf16.mxu0 0
    %130 = vmatpush2.bf16.msra.mxu0 0
    %131 = vmatprep.subr.bf16.mxu0 0
    %132 = vmatpush2.bf16.msra.mxu0 0
    %133 = vmatprep.subr.bf16.mxu0 0
    %134 = vmatpush2.bf16.msra.mxu0 0
    %135 = vmatprep.subr.bf16.mxu0 0
    %136 = vmatpush2.bf16.msra.mxu0 0
    %137 = vmatprep.subr.bf16.mxu0 0
    %138 = vmatpush2.bf16.msra.mxu0 0
    %139 = vmatprep.subr.bf16.mxu0 0
    %140 = vmatpush2.bf16.msra.mxu0 0
    %141 = vmatprep.subr.bf16.mxu0 0
    %142 = vmatpush2.bf16.msra.mxu0 0
    %143 = vmatprep.mubr.bf16.mxu0 0
    %144 = vmatmul.mubr.bf16.gmra.mxu0 %v109
    %v145 = vpop.f32.mrf.mxu0
    %v146 = vadd.f32 %v90, %v145
    %v147 = vpop.f32.mrf.mxu0
    %v148 = vadd.f32 %v94, %v147
    %v149 = vpop.f32.mrf.mxu0
    %v150 = vpop.f32.mrf.mxu0
    %151 = vdwg.mxu0
    %v152 = vmax.f32 %v146, 0.0
    %v153 = vmax.f32 %v148, 0.0
    %v154 = vpack.c.bf16 %v152, %v152
    %v155 = vpack.c.bf16 %v153, %v153
    %v156 = vld [vmem:[#allocation7] sm:$0xf]
    %v157 = vld [vmem:[#allocation7 + $0x4] sm:$0xf]
    %v158 = vld [vmem:[#allocation7 + $0x8] sm:$0xf]
    %v159 = vld [vmem:[#allocation7 + $0xc] sm:$0xf]
    %v160 = vld [vmem:[#allocation7 + $0x10] sm:$0xf]
    %v161 = vld [vmem:[#allocation7 + $0x14] sm:$0xf]
    %v162 = vld [vmem:[#allocation7 + $0x18] sm:$0xf]
    %v163 = vld [vmem:[#allocation7 + $0x1c] sm:$0xf]
    %v164 = vld [vmem:[#allocation7 + $0x20] sm:$0xf]
    %v165 = vld [vmem:[#allocation7 + $0x24] sm:$0xf]
    %v166 = vld [vmem:[#allocation7 + $0x28] sm:$0xf]
    %v167 = vld [vmem:[#allocation7 + $0x2c] sm:$0xf]
    %v168 = vld [vmem:[#allocation7 + $0x30] sm:$0xf]
    %v169 = vld [vmem:[#allocation7 + $0x34] sm:$0xf]
    %v170 = vld [vmem:[#allocation7 + $0x38] sm:$0xf]
    %v171 = vld [vmem:[#allocation7 + $0x3c] sm:$0xf]
    %v172 = vld [vmem:[%s4] sm:$0x1]
    %v174 = vlaneseq
    %v175 = vshrl.u32 %v174, 7
    %v176 = vsub.s32 0, %v175
    %v177 = vrot.slane %v172, %v176
    %v195 = vunpack.c.l.b16 %v156
    %v196 = vunpack.c.l.b16 %v157
    %v197 = vunpack.c.l.b16 %v158
    %v198 = vunpack.c.l.b16 %v159
    %v199 = vunpack.c.l.b16 %v160
    %v200 = vunpack.c.l.b16 %v161
    %v201 = vunpack.c.l.b16 %v162
    %v202 = vunpack.c.l.b16 %v163
    %v203 = vunpack.c.l.b16 %v164
    %v204 = vunpack.c.l.b16 %v165
    %v205 = vunpack.c.l.b16 %v166
    %v206 = vunpack.c.l.b16 %v167
    %v207 = vunpack.c.l.b16 %v168
    %v208 = vunpack.c.l.b16 %v169
    %v209 = vunpack.c.l.b16 %v170
    %v210 = vunpack.c.l.b16 %v171
    %v211 = vpack.c.b16 %v196, %v195
    %v212 = vpack.c.b16 %v198, %v197
    %v213 = vpack.c.b16 %v200, %v199
    %v214 = vpack.c.b16 %v202, %v201
    %v215 = vpack.c.b16 %v204, %v203
    %v216 = vpack.c.b16 %v206, %v205
    %v217 = vpack.c.b16 %v208, %v207
    %v218 = vpack.c.b16 %v210, %v209
    %227 = vmatprep.subr.bf16.mxu0 0
    %228 = vmatpush1.bf16.msra.mxu0 %v218
    %229 = vmatprep.subr.bf16.mxu0 0
    %230 = vmatpush1.bf16.msra.mxu0 %v217
    %231 = vmatprep.subr.bf16.mxu0 0
    %232 = vmatpush1.bf16.msra.mxu0 %v216
    %233 = vmatprep.subr.bf16.mxu0 0
    %234 = vmatpush1.bf16.msra.mxu0 %v215
    %235 = vmatprep.subr.bf16.mxu0 0
    %236 = vmatpush1.bf16.msra.mxu0 %v214
    %237 = vmatprep.subr.bf16.mxu0 0
    %238 = vmatpush1.bf16.msra.mxu0 %v213
    %239 = vmatprep.subr.bf16.mxu0 0
    %240 = vmatpush1.bf16.msra.mxu0 %v212
    %241 = vmatprep.subr.bf16.mxu0 0
    %242 = vmatpush1.bf16.msra.mxu0 %v211
    %243 = vmatprep.subr.bf16.mxu0 0
    %244 = vmatpush2.bf16.msra.mxu0 0
    %245 = vmatprep.subr.bf16.mxu0 0
    %246 = vmatpush2.bf16.msra.mxu0 0
    %247 = vmatprep.subr.bf16.mxu0 0
    %248 = vmatpush2.bf16.msra.mxu0 0
    %249 = vmatprep.subr.bf16.mxu0 0
    %250 = vmatpush2.bf16.msra.mxu0 0
    %251 = vmatprep.subr.bf16.mxu0 0
    %252 = vmatpush2.bf16.msra.mxu0 0
    %253 = vmatprep.subr.bf16.mxu0 0
    %254 = vmatpush2.bf16.msra.mxu0 0
    %255 = vmatprep.subr.bf16.mxu0 0
    %256 = vmatpush2.bf16.msra.mxu0 0
    %257 = vmatprep.subr.bf16.mxu0 0
    %258 = vmatpush2.bf16.msra.mxu0 0
    %259 = vmatprep.mubr.bf16.mxu0 0
    %260 = vmatmul.mubr.bf16.gmra.mxu0 %v154
    %v261 = vpop.f32.mrf.mxu0
    %v262 = vadd.f32 %v177, %v261
    %v263 = vpop.f32.mrf.mxu0
    %v264 = vpop.f32.mrf.mxu0
    %v265 = vpop.f32.mrf.mxu0
    %266 = vdwg.mxu0
    %v267 = vmax.f32 %v262, 0.0
    %v268 = vpack.c.bf16 %v267, %v267
    %v269 = vld [vmem:[#allocation8] sm:$0xf]
    %v270 = vld [vmem:[#allocation8 + $0x4] sm:$0xf]
    %v271 = vld [vmem:[#allocation8 + $0x8] sm:$0xf]
    %v272 = vld [vmem:[#allocation8 + $0xc] sm:$0xf]
    %v273 = vld [vmem:[#allocation8 + $0x10] sm:$0xf]
    %v274 = vld [vmem:[#allocation8 + $0x14] sm:$0xf]
    %v275 = vld [vmem:[#allocation8 + $0x18] sm:$0xf]
    %v276 = vld [vmem:[#allocation8 + $0x1c] sm:$0xf]
    %v277 = vld [vmem:[#allocation8 + $0x20] sm:$0xf]
    %v278 = vld [vmem:[#allocation8 + $0x24] sm:$0xf]
    %v279 = vld [vmem:[#allocation8 + $0x28] sm:$0xf]
    %v280 = vld [vmem:[#allocation8 + $0x2c] sm:$0xf]
    %v281 = vld [vmem:[#allocation8 + $0x30] sm:$0xf]
    %v282 = vld [vmem:[#allocation8 + $0x34] sm:$0xf]
    %v283 = vld [vmem:[#allocation8 + $0x38] sm:$0xf]
    %v284 = vld [vmem:[#allocation8 + $0x3c] sm:$0xf]
    %s285 = scalar_lea.vmem [#allocation7], 64
    %v286 = vld [vmem:[%s285] sm:$0xf]
    %v287 = vld [vmem:[%s285 + $0x4] sm:$0xf]
    %v288 = vld [vmem:[%s285 + $0x8] sm:$0xf]
    %v289 = vld [vmem:[%s285 + $0xc] sm:$0xf]
    %v290 = vld [vmem:[%s285 + $0x10] sm:$0xf]
    %v291 = vld [vmem:[%s285 + $0x14] sm:$0xf]
    %v292 = vld [vmem:[%s285 + $0x18] sm:$0xf]
    %v293 = vld [vmem:[%s285 + $0x1c] sm:$0xf]
    %v294 = vld [vmem:[%s285 + $0x20] sm:$0xf]
    %v295 = vld [vmem:[%s285 + $0x24] sm:$0xf]
    %v296 = vld [vmem:[%s285 + $0x28] sm:$0xf]
    %v297 = vld [vmem:[%s285 + $0x2c] sm:$0xf]
    %v298 = vld [vmem:[%s285 + $0x30] sm:$0xf]
    %v299 = vld [vmem:[%s285 + $0x34] sm:$0xf]
    %v300 = vld [vmem:[%s285 + $0x38] sm:$0xf]
    %v301 = vld [vmem:[%s285 + $0x3c] sm:$0xf]
    %s302 = scalar_lea.vmem %s4, 1
    %v303 = vld [vmem:[%s302] sm:$0x1]
    %v305 = vlaneseq
    %v306 = vshrl.u32 %v305, 7
    %v307 = vsub.s32 0, %v306
    %v308 = vrot.slane %v303, %v307
    %v326 = vunpack.c.l.b16 %v286
    %v327 = vunpack.c.l.b16 %v287
    %v328 = vunpack.c.l.b16 %v288
    %v329 = vunpack.c.l.b16 %v289
    %v330 = vunpack.c.l.b16 %v290
    %v331 = vunpack.c.l.b16 %v291
    %v332 = vunpack.c.l.b16 %v292
    %v333 = vunpack.c.l.b16 %v293
    %v334 = vunpack.c.l.b16 %v294
    %v335 = vunpack.c.l.b16 %v295
    %v336 = vunpack.c.l.b16 %v296
    %v337 = vunpack.c.l.b16 %v297
    %v338 = vunpack.c.l.b16 %v298
    %v339 = vunpack.c.l.b16 %v299
    %v340 = vunpack.c.l.b16 %v300
    %v341 = vunpack.c.l.b16 %v301
    %v342 = vpack.c.b16 %v327, %v326
    %v343 = vpack.c.b16 %v329, %v328
    %v344 = vpack.c.b16 %v331, %v330
    %v345 = vpack.c.b16 %v333, %v332
    %v346 = vpack.c.b16 %v335, %v334
    %v347 = vpack.c.b16 %v337, %v336
    %v348 = vpack.c.b16 %v339, %v338
    %v349 = vpack.c.b16 %v341, %v340
    %358 = vmatprep.subr.bf16.mxu0 0
    %359 = vmatpush1.bf16.msra.mxu0 %v349
    %360 = vmatprep.subr.bf16.mxu0 0
    %361 = vmatpush1.bf16.msra.mxu0 %v348
    %362 = vmatprep.subr.bf16.mxu0 0
    %363 = vmatpush1.bf16.msra.mxu0 %v347
    %364 = vmatprep.subr.bf16.mxu0 0
    %365 = vmatpush1.bf16.msra.mxu0 %v346
    %366 = vmatprep.subr.bf16.mxu0 0
    %367 = vmatpush1.bf16.msra.mxu0 %v345
    %368 = vmatprep.subr.bf16.mxu0 0
    %369 = vmatpush1.bf16.msra.mxu0 %v344
    %370 = vmatprep.subr.bf16.mxu0 0
    %371 = vmatpush1.bf16.msra.mxu0 %v343
    %372 = vmatprep.subr.bf16.mxu0 0
    %373 = vmatpush1.bf16.msra.mxu0 %v342
    %374 = vmatprep.subr.bf16.mxu0 0
    %375 = vmatpush2.bf16.msra.mxu0 0
    %376 = vmatprep.subr.bf16.mxu0 0
    %377 = vmatpush2.bf16.msra.mxu0 0
    %378 = vmatprep.subr.bf16.mxu0 0
    %379 = vmatpush2.bf16.msra.mxu0 0
    %380 = vmatprep.subr.bf16.mxu0 0
    %381 = vmatpush2.bf16.msra.mxu0 0
    %382 = vmatprep.subr.bf16.mxu0 0
    %383 = vmatpush2.bf16.msra.mxu0 0
    %384 = vmatprep.subr.bf16.mxu0 0
    %385 = vmatpush2.bf16.msra.mxu0 0
    %386 = vmatprep.subr.bf16.mxu0 0
    %387 = vmatpush2.bf16.msra.mxu0 0
    %388 = vmatprep.subr.bf16.mxu0 0
    %389 = vmatpush2.bf16.msra.mxu0 0
    %390 = vmatprep.mubr.bf16.mxu0 0
    %391 = vmatmul.mubr.bf16.gmra.mxu0 %v155
    %v392 = vpop.f32.mrf.mxu0
    %v393 = vadd.f32 %v308, %v392
    %v394 = vpop.f32.mrf.mxu0
    %v395 = vpop.f32.mrf.mxu0
    %v396 = vpop.f32.mrf.mxu0
    %397 = vdwg.mxu0
    %v398 = vmax.f32 %v393, 0.0
    %v399 = vpack.c.bf16 %v398, %v398
    %s400 = scalar_lea.vmem [#allocation8], 64
    %v401 = vld [vmem:[%s400] sm:$0xf]
    %v402 = vld [vmem:[%s400 + $0x4] sm:$0xf]
    %v403 = vld [vmem:[%s400 + $0x8] sm:$0xf]
    %v404 = vld [vmem:[%s400 + $0xc] sm:$0xf]
    %v405 = vld [vmem:[%s400 + $0x10] sm:$0xf]
    %v406 = vld [vmem:[%s400 + $0x14] sm:$0xf]
    %v407 = vld [vmem:[%s400 + $0x18] sm:$0xf]
    %v408 = vld [vmem:[%s400 + $0x1c] sm:$0xf]
    %v409 = vld [vmem:[%s400 + $0x20] sm:$0xf]
    %v410 = vld [vmem:[%s400 + $0x24] sm:$0xf]
    %v411 = vld [vmem:[%s400 + $0x28] sm:$0xf]
    %v412 = vld [vmem:[%s400 + $0x2c] sm:$0xf]
    %v413 = vld [vmem:[%s400 + $0x30] sm:$0xf]
    %v414 = vld [vmem:[%s400 + $0x34] sm:$0xf]
    %v415 = vld [vmem:[%s400 + $0x38] sm:$0xf]
    %v416 = vld [vmem:[%s400 + $0x3c] sm:$0xf]
    %v433 = vunpack.c.l.b16 %v401
    %v434 = vunpack.c.l.b16 %v402
    %v435 = vunpack.c.l.b16 %v403
    %v436 = vunpack.c.l.b16 %v404
    %v437 = vunpack.c.l.b16 %v405
    %v438 = vunpack.c.l.b16 %v406
    %v439 = vunpack.c.l.b16 %v407
    %v440 = vunpack.c.l.b16 %v408
    %v441 = vunpack.c.l.b16 %v409
    %v442 = vunpack.c.l.b16 %v410
    %v443 = vunpack.c.l.b16 %v411
    %v444 = vunpack.c.l.b16 %v412
    %v445 = vunpack.c.l.b16 %v413
    %v446 = vunpack.c.l.b16 %v414
    %v447 = vunpack.c.l.b16 %v415
    %v448 = vunpack.c.l.b16 %v416
    %v449 = vpack.c.b16 %v434, %v433
    %v450 = vpack.c.b16 %v436, %v435
    %v451 = vpack.c.b16 %v438, %v437
    %v452 = vpack.c.b16 %v440, %v439
    %v453 = vpack.c.b16 %v442, %v441
    %v454 = vpack.c.b16 %v444, %v443
    %v455 = vpack.c.b16 %v446, %v445
    %v456 = vpack.c.b16 %v448, %v447
    %465 = vmatprep.subr.bf16.mxu0 0
    %466 = vmatpush1.bf16.msra.mxu0 %v456
    %467 = vmatprep.subr.bf16.mxu0 0
    %468 = vmatpush1.bf16.msra.mxu0 %v455
    %469 = vmatprep.subr.bf16.mxu0 0
    %470 = vmatpush1.bf16.msra.mxu0 %v454
    %471 = vmatprep.subr.bf16.mxu0 0
    %472 = vmatpush1.bf16.msra.mxu0 %v453
    %473 = vmatprep.subr.bf16.mxu0 0
    %474 = vmatpush1.bf16.msra.mxu0 %v452
    %475 = vmatprep.subr.bf16.mxu0 0
    %476 = vmatpush1.bf16.msra.mxu0 %v451
    %477 = vmatprep.subr.bf16.mxu0 0
    %478 = vmatpush1.bf16.msra.mxu0 %v450
    %479 = vmatprep.subr.bf16.mxu0 0
    %480 = vmatpush1.bf16.msra.mxu0 %v449
    %481 = vmatprep.subr.bf16.mxu0 0
    %482 = vmatpush2.bf16.msra.mxu0 0
    %483 = vmatprep.subr.bf16.mxu0 0
    %484 = vmatpush2.bf16.msra.mxu0 0
    %485 = vmatprep.subr.bf16.mxu0 0
    %486 = vmatpush2.bf16.msra.mxu0 0
    %487 = vmatprep.subr.bf16.mxu0 0
    %488 = vmatpush2.bf16.msra.mxu0 0
    %489 = vmatprep.subr.bf16.mxu0 0
    %490 = vmatpush2.bf16.msra.mxu0 0
    %491 = vmatprep.subr.bf16.mxu0 0
    %492 = vmatpush2.bf16.msra.mxu0 0
    %493 = vmatprep.subr.bf16.mxu0 0
    %494 = vmatpush2.bf16.msra.mxu0 0
    %495 = vmatprep.subr.bf16.mxu0 0
    %496 = vmatpush2.bf16.msra.mxu0 0
    %497 = vmatprep.mubr.bf16.mxu0 0
    %498 = vmatmul.mubr.bf16.gmra.mxu0 %v399
    %v499 = vpop.f32.mrf.mxu0
    %v500 = vadd.f32 0.0, %v499
    %v501 = vpop.f32.mrf.mxu0
    %v502 = vpop.f32.mrf.mxu0
    %v503 = vpop.f32.mrf.mxu0
    %504 = vdwg.mxu0
    %v521 = vunpack.c.l.b16 %v269
    %v522 = vunpack.c.l.b16 %v270
    %v523 = vunpack.c.l.b16 %v271
    %v524 = vunpack.c.l.b16 %v272
    %v525 = vunpack.c.l.b16 %v273
    %v526 = vunpack.c.l.b16 %v274
    %v527 = vunpack.c.l.b16 %v275
    %v528 = vunpack.c.l.b16 %v276
    %v529 = vunpack.c.l.b16 %v277
    %v530 = vunpack.c.l.b16 %v278
    %v531 = vunpack.c.l.b16 %v279
    %v532 = vunpack.c.l.b16 %v280
    %v533 = vunpack.c.l.b16 %v281
    %v534 = vunpack.c.l.b16 %v282
    %v535 = vunpack.c.l.b16 %v283
    %v536 = vunpack.c.l.b16 %v284
    %v537 = vpack.c.b16 %v522, %v521
    %v538 = vpack.c.b16 %v524, %v523
    %v539 = vpack.c.b16 %v526, %v525
    %v540 = vpack.c.b16 %v528, %v527
    %v541 = vpack.c.b16 %v530, %v529
    %v542 = vpack.c.b16 %v532, %v531
    %v543 = vpack.c.b16 %v534, %v533
    %v544 = vpack.c.b16 %v536, %v535
    %553 = vmatprep.subr.bf16.mxu0 0
    %554 = vmatpush1.bf16.msra.mxu0 %v544
    %555 = vmatprep.subr.bf16.mxu0 0
    %556 = vmatpush1.bf16.msra.mxu0 %v543
    %557 = vmatprep.subr.bf16.mxu0 0
    %558 = vmatpush1.bf16.msra.mxu0 %v542
    %559 = vmatprep.subr.bf16.mxu0 0
    %560 = vmatpush1.bf16.msra.mxu0 %v541
    %561 = vmatprep.subr.bf16.mxu0 0
    %562 = vmatpush1.bf16.msra.mxu0 %v540
    %563 = vmatprep.subr.bf16.mxu0 0
    %564 = vmatpush1.bf16.msra.mxu0 %v539
    %565 = vmatprep.subr.bf16.mxu0 0
    %566 = vmatpush1.bf16.msra.mxu0 %v538
    %567 = vmatprep.subr.bf16.mxu0 0
    %568 = vmatpush1.bf16.msra.mxu0 %v537
    %569 = vmatprep.subr.bf16.mxu0 0
    %570 = vmatpush2.bf16.msra.mxu0 0
    %571 = vmatprep.subr.bf16.mxu0 0
    %572 = vmatpush2.bf16.msra.mxu0 0
    %573 = vmatprep.subr.bf16.mxu0 0
    %574 = vmatpush2.bf16.msra.mxu0 0
    %575 = vmatprep.subr.bf16.mxu0 0
    %576 = vmatpush2.bf16.msra.mxu0 0
    %577 = vmatprep.subr.bf16.mxu0 0
    %578 = vmatpush2.bf16.msra.mxu0 0
    %579 = vmatprep.subr.bf16.mxu0 0
    %580 = vmatpush2.bf16.msra.mxu0 0
    %581 = vmatprep.subr.bf16.mxu0 0
    %582 = vmatpush2.bf16.msra.mxu0 0
    %583 = vmatprep.subr.bf16.mxu0 0
    %584 = vmatpush2.bf16.msra.mxu0 0
    %585 = vmatprep.mubr.bf16.mxu0 0
    %586 = vmatmul.mubr.bf16.gmra.mxu0 %v268
    %v587 = vpop.f32.mrf.mxu0
    %v588 = vadd.f32 %v500, %v587
    %v589 = vpop.f32.mrf.mxu0
    %v590 = vpop.f32.mrf.mxu0
    %v591 = vpop.f32.mrf.mxu0
    %592 = vdwg.mxu0
    %v593 = vld [vmem:[%s6] sm:$0x1]
    %v595 = vlaneseq
    %v596 = vshrl.u32 %v595, 7
    %v597 = vsub.s32 0, %v596
    %v598 = vrot.slane %v593, %v597
    %v600 = vadd.f32 %v588, %v598
    %601 = vst [vmem:[#allocation10] sm:$0xff] %v600
    // Predicated region
    $region46: #{tpu_custom_call.1} parent=1 // pred_check
      _
    $region47: #{tpu_custom_call.1} parent=1 // pred_check_branch
      %603 = sbr.rel (0) target = $region49
    $region48: #{tpu_custom_call.1} parent=1 // pred_region
      %s605 = ssub.s32 128, 128
      %606 = vsyncadd [#allocation4], %s605
      %s608 = sshll.u32 [#allocation10], 4
      %s609 = int_to_ptr.vmem [resolvable:$true] %s608
      %611 = dma.vmem_to_hbm [thread:$0]  %s609, 128, %s7, [#allocation4]
    $region49: #{tpu_custom_call.1} parent=1 // pred_fallthru
      _
    // Predicated region
    $region50: #{tpu_custom_call.1} parent=1 // pred_check
      _
    $region51: #{tpu_custom_call.1} parent=1 // pred_check_branch
      %613 = sbr.rel (0) target = $region53
    $region52: #{tpu_custom_call.1} parent=1 // pred_region
      %614 = dma.done [#allocation4], 128
    $region53: #{tpu_custom_call.1} parent=1 // pred_fallthru
      _
    %615 = vsyncpa [#allocation3], 1
    %616 = vsyncpa [#allocation6], 1
    %617 = vsyncpa [#allocation9], 1
    %618 = vsyncpa [#allocation4], 1

</llo_original>
